<compile_context>
chip_gen: v5e
topology: v5e:2x2
jax: 0.10.0
libtpu: 0.0.40
codegen_flags: <defaults>
</compile_context>

<pallas_src>
import functools

import jax
import jax.numpy as jnp
from jax import lax
from jax.experimental import pallas as pl
from jax.experimental.pallas import tpu as pltpu

_NEG_FILL = -10000.0   # Megatron mask_func fill value
_F32_TEMPS = 5         # live fp32 (tile_sq, sk) temporaries per head-iteration (estimate)


# ---------------------------------------------------------------------------
# Kernels
# ---------------------------------------------------------------------------
def _scale_mask_softmax_kernel(x_ref, mask_ref, o_ref, *, scale, approx):
    # x_ref / o_ref: (h_tile, tile_sq, sk); mask_ref: (tile_sq, sk) or (1, sk) int8
    h_tile, tile_sq, sk = x_ref.shape
    # Hoist the mask unpack + broadcast out of the head loop.
    masked = jnp.broadcast_to(mask_ref[...] != 0, (tile_sq, sk))

    def body(h, carry):
        x = x_ref[h].astype(jnp.float32) * scale            # fp32 softmax
        x = jnp.where(masked, jnp.float32(_NEG_FILL), x)     # masked_fill semantics
        x = x - jnp.max(x, axis=-1, keepdims=True)           # stable softmax
        e = jnp.exp(x)
        d = jnp.sum(e, axis=-1, keepdims=True)
        if approx:
            y = e * pl.reciprocal(d, approx=True)             # EUP vrcp (~free slot)
        else:
            y = e / d                                         # exact for fp32 outputs
        o_ref[h] = y.astype(o_ref.dtype)
        return carry

    lax.fori_loop(0, h_tile, body, 0, unroll=True)


def _scaled_causal_softmax_kernel(x_ref, o_ref, *, scale, approx):
    # ScaledUpperTriangMaskedSoftmax: mask generated in-kernel, no mask input.
    h_tile, tile_sq, sk = x_ref.shape
    row0 = pl.program_id(1) * tile_sq
    rows = row0 + lax.broadcasted_iota(jnp.int32, (tile_sq, sk), 0)
    cols = lax.broadcasted_iota(jnp.int32, (tile_sq, sk), 1)
    masked = cols > rows

    def body(h, carry):
        x = x_ref[h].astype(jnp.float32) * scale
        x = jnp.where(masked, jnp.float32(_NEG_FILL), x)
        x = x - jnp.max(x, axis=-1, keepdims=True)
        e = jnp.exp(x)
        d = jnp.sum(e, axis=-1, keepdims=True)
        if approx:
            y = e * pl.reciprocal(d, approx=True)
        else:
            y = e / d
        o_ref[h] = y.astype(o_ref.dtype)
        return carry

    lax.fori_loop(0, h_tile, body, 0, unroll=True)


# ---------------------------------------------------------------------------
# Tiling / VMEM heuristics
# ---------------------------------------------------------------------------
def _vmem_cap_bytes():
    """Generation-aware cap for the compiler-scoped VMEM limit."""
    phys = None
    try:
        info = pltpu.get_tpu_info()
        phys = int(getattr(info, "vmem_capacity_bytes", 0)) or None
    except Exception:
        phys = None
    if phys is None:
        phys = 64 << 20               # conservative default (v7x-class)
    if phys <= (64 << 20):            # v7x: 64 MiB physical per TC
        return 44 << 20
    return 64 << 20                   # v5e / v6e: 128 MiB physical


def _choose_tiles(n_heads, sq, sk, itemsize, budget_bytes, target_block_bytes):
    """Pick (h_tile, tile_sq).

    fp32 temporaries stay (tile_sq, sk) (one head live at a time inside the
    in-kernel loop) while the DMA block grows along the head axis to amortize
    the ~0.35us per-grid-step pipeline overhead.
    """
    f32_row = _F32_TEMPS * 4 * sk     # fp32 temps per sq row (one head live)
    mask_row = 2 * sk                 # int8 mask row, double-buffered
    x_row = 4 * itemsize * sk         # x in + out, each double-buffered, per head

    # 1) tile_sq: keep the fp32 working set to <= ~1/3 of the budget,
    #    quantized to 32 (then 16, 8) for native sub-32-bit tiling.
    cap_sq = max(8, (budget_bytes // 3) // (f32_row + mask_row))
    if sq <= cap_sq:
        tile_sq = sq                  # block dim == full array dim: always legal
    else:
        tile_sq = 8
        for q in (32, 16, 8):
            t = (cap_sq // q) * q
            if t >= q:
                tile_sq = t
                break

    # 2) h_tile: grow over divisors of n_heads until the x block reaches the
    #    per-step DMA target or the remaining VMEM budget is used up.
    rem = budget_bytes - tile_sq * (f32_row + mask_row)
    cap_rows = max(tile_sq, rem // x_row)
    h_tile = 1
    for h in range(1, n_heads + 1):
        if n_heads % h:
            continue
        if h * tile_sq > cap_rows:
            break
        h_tile = h
        if h * tile_sq * sk * itemsize >= target_block_bytes:
            break
    return h_tile, tile_sq


# ---------------------------------------------------------------------------
# Wrapper
# ---------------------------------------------------------------------------
def fused_scale_mask_softmax(x, mask=None, scale=1.0, *, causal=False, donate_x=False):
    """x: (b, np, sq, sk); mask: (b, 1, sq, sk) or (b, 1, 1, sk) (nonzero => masked).

    causal=True reproduces ScaledUpperTriangMaskedSoftmax (sq == sk) with the
    triangular mask generated in-kernel; `mask` is ignored in that case.
    """
    b, n_heads, sq, sk = x.shape
    if scale is None:
        scale = 1.0
    itemsize = jnp.dtype(x.dtype).itemsize
    # Approx reciprocal only when the output dtype quantizes harder than the
    # reciprocal error; exact division for fp32 outputs (reference parity).
    approx = x.dtype in (jnp.bfloat16, jnp.float16)

    vmem_cap = _vmem_cap_bytes()
    budget = vmem_cap - (6 << 20)          # headroom for compiler scratch
    target_block = 4 << 20                 # x bytes/step -> ~8 MiB/step read+write DMA
    h_tile, tile_sq = _choose_tiles(n_heads, sq, sk, itemsize, budget, target_block)

    n_sq_tiles = pl.cdiv(sq, tile_sq)      # non-dividing sq handled by padding
    n_h_tiles = n_heads // h_tile
    grid = (b, n_sq_tiles, n_h_tiles)

    x_blk = h_tile * tile_sq * sk * itemsize
    footprint = 4 * x_blk + 2 * tile_sq * sk + _F32_TEMPS * 4 * tile_sq * sk
    vmem_limit = int(min(max(footprint + footprint // 4 + (2 << 20), 16 << 20), vmem_cap))

    x_spec = pl.BlockSpec((None, h_tile, tile_sq, sk), lambda bi, si, hi: (bi, hi, si, 0))
    out_spec = pl.BlockSpec((None, h_tile, tile_sq, sk), lambda bi, si, hi: (bi, hi, si, 0))
    compiler_params = pltpu.CompilerParams(
        # heads innermost and "arbitrary": preserves mask-block reuse across
        # heads and keeps megacore (v7x) splitting on b / sq instead.
        dimension_semantics=("parallel", "parallel", "arbitrary"),
        vmem_limit_bytes=vmem_limit,
    )
    io_alias = {0: 0} if donate_x else {}

    if causal:
        assert sq == sk, "causal (upper-triangular) mask is only for self attention"
        kernel = functools.partial(
            _scaled_causal_softmax_kernel, scale=float(scale), approx=approx)
        return pl.pallas_call(
            kernel,
            out_shape=jax.ShapeDtypeStruct(x.shape, x.dtype),
            grid_spec=pltpu.PrefetchScalarGridSpec(
                num_scalar_prefetch=0, grid=grid,
                in_specs=[x_spec], out_specs=out_spec),
            compiler_params=compiler_params,
            input_output_aliases=io_alias,
        )(x)

    assert mask is not None, "general path requires a mask"
    assert mask.shape[0] == b and mask.shape[1] == 1 and mask.shape[3] == sk
    mask_sq = mask.shape[2]
    assert mask_sq in (1, sq), "mask must be (b,1,sq,sk) or (b,1,1,sk)"
    # (mask != 0) keeps exact bool semantics (a float 0.5 stays "masked");
    # int8 gives 4x less HBM/VMEM traffic than int32.
    mask_i8 = (mask != 0).astype(jnp.int8)

    if mask_sq == sq:
        mask_spec = pl.BlockSpec((None, None, tile_sq, sk),
                                 lambda bi, si, hi: (bi, 0, si, 0))
    else:
        # Row-broadcast padding mask: one (1, sk) row per batch, resident in
        # VMEM across every sq-tile and head (mask HBM traffic / sq).
        mask_spec = pl.BlockSpec((None, None, 1, sk),
                                 lambda bi, si, hi: (bi, 0, 0, 0))

    kernel = functools.partial(
        _scale_mask_softmax_kernel, scale=float(scale), approx=approx)
    return pl.pallas_call(
        kernel,
        out_shape=jax.ShapeDtypeStruct(x.shape, x.dtype),
        grid_spec=pltpu.PrefetchScalarGridSpec(
            num_scalar_prefetch=0, grid=grid,
            in_specs=[x_spec, mask_spec], out_specs=out_spec),
        compiler_params=compiler_params,
        input_output_aliases=io_alias,
    )(x, mask_i8)


# ---------------------------------------------------------------------------
# Reference + harness
# ---------------------------------------------------------------------------
def _reference(x, mask, scale, causal=False):
    # Pure-JAX reproduction of forward_torch_softmax with the Megatron
    # mask_func (masked_fill(mask, -10000)).
    xf = x.astype(jnp.float32) * scale
    if causal:
        sq, sk = x.shape[-2], x.shape[-1]
        cm = jnp.triu(jnp.ones((sq, sk), dtype=bool), k=1)[None, None]
        xf = jnp.where(cm, jnp.float32(_NEG_FILL), xf)
    if mask is not None:
        xf = jnp.where(mask != 0, jnp.float32(_NEG_FILL), xf)
    y = jax.nn.softmax(xf, axis=-1)
    return y.astype(x.dtype)


if __name__ == "__main__":
    key = jax.random.PRNGKey(0)
    scale = 0.125  # e.g. 1/sqrt(head_dim)

    # ----- 1) general mask path, bf16, (b,1,sq,sk) mask -----
    b, n_heads, sq, sk = 2, 4, 8, 128
    k1, k2, k3 = jax.random.split(key, 3)
    x = jax.random.normal(k1, (b, n_heads, sq, sk), dtype=jnp.float32).astype(jnp.bfloat16)
    band = jnp.triu(jnp.ones((sq, sk), dtype=jnp.int32), k=1)[None, None]
    pad = (jax.random.uniform(k2, (b, 1, 1, sk)) < 0.2).astype(jnp.int32)
    mask_full = jnp.broadcast_to(jnp.clip(band + pad, 0, 1), (b, 1, sq, sk))

    y = jax.block_until_ready(fused_scale_mask_softmax(x, mask_full, scale=scale))
    y_ref = _reference(x, mask_full, scale)
    assert y.shape == x.shape and y.dtype == x.dtype
    assert jnp.allclose(y.astype(jnp.float32), y_ref.astype(jnp.float32),
                        atol=2e-2, rtol=2e-2)

    # ----- 2) padding-only mask path, bf16, (b,1,1,sk) mask (no pre-broadcast) -----
    mask_pad = pad  # (b, 1, 1, sk)
    y2 = jax.block_until_ready(fused_scale_mask_softmax(x, mask_pad, scale=scale))
    y2_ref = _reference(x, mask_pad, scale)
    assert jnp.allclose(y2.astype(jnp.float32), y2_ref.astype(jnp.float32),
                        atol=2e-2, rtol=2e-2)

    # ----- 3) causal (ScaledUpperTriangMaskedSoftmax) path, bf16, sq == sk -----
    sq2 = sk2 = 128
    xc = jax.random.normal(k3, (b, n_heads, sq2, sk2), dtype=jnp.float32).astype(jnp.bfloat16)
    y3 = jax.block_until_ready(fused_scale_mask_softmax(xc, None, scale=scale, causal=True))
    y3_ref = _reference(xc, None, scale, causal=True)
    assert jnp.allclose(y3.astype(jnp.float32), y3_ref.astype(jnp.float32),
                        atol=2e-2, rtol=2e-2)

    # ----- 4) fp32 path (exact reciprocal, fp32-tight tolerance) -----
    xf32 = x.astype(jnp.float32)
    y4 = jax.block_until_ready(fused_scale_mask_softmax(xf32, mask_full, scale=scale))
    y4_ref = _reference(xf32, mask_full, scale)
    assert y4.dtype == jnp.float32
    assert jnp.allclose(y4, y4_ref, atol=1e-6, rtol=1e-5)

    print("KERNEL_OK")
</pallas_src>

<mosaic_0001>
module attributes {stable_mosaic.version = 11 : i64} {
  func.func @_scale_mask_softmax_kernel(%arg0: i32, %arg1: i32, %arg2: i32, %arg3: memref<1x4x8x128xbf16, #tpu.memory_space<vmem>>, %arg4: memref<1x1x8x128xi8, #tpu.memory_space<vmem>>, %arg5: memref<1x4x8x128xbf16, #tpu.memory_space<vmem>>) attributes {dimension_semantics = [#tpu.dimension_semantics<parallel>, #tpu.dimension_semantics<parallel>, #tpu.dimension_semantics<arbitrary>], iteration_bounds = array<i64: 2, 1, 1>, scalar_prefetch = 0 : i64, scratch_operands = 0 : i64, tpu.core_type = #tpu.core_type<tc>, window_params = [{transform_indices = @transform_0, window_bounds = array<i64: 1, 4, 8, 128>}, {transform_indices = @transform_1, window_bounds = array<i64: 1, 1, 8, 128>}, {transform_indices = @transform_2, window_bounds = array<i64: 1, 4, 8, 128>}]} {
    %c0 = arith.constant 0 : index
    %c0_0 = arith.constant 0 : index
    %c0_1 = arith.constant 0 : index
    %c0_2 = arith.constant 0 : index
    %0 = vector.load %arg4[%c0, %c0_0, %c0_1, %c0_2] : memref<1x1x8x128xi8, #tpu.memory_space<vmem>>, vector<1x1x8x128xi8>
    %1 = vector.shape_cast %0 : vector<1x1x8x128xi8> to vector<8x128xi8>
    %c0_i8 = arith.constant 0 : i8
    %2 = vector.broadcast %c0_i8 : i8 to vector<8x128xi8>
    %3 = arith.cmpi ne, %1, %2 : vector<8x128xi8>
    %c0_i32 = arith.constant 0 : i32
    %c0_3 = arith.constant 0 : index
    %4 = arith.index_cast %c0_i32 : i32 to index
    %c0_4 = arith.constant 0 : index
    %c0_5 = arith.constant 0 : index
    %5 = vector.load %arg3[%c0_3, %4, %c0_4, %c0_5] : memref<1x4x8x128xbf16, #tpu.memory_space<vmem>>, vector<1x1x8x128xbf16>
    %6 = vector.shape_cast %5 : vector<1x1x8x128xbf16> to vector<8x128xbf16>
    %7 = arith.extf %6 : vector<8x128xbf16> to vector<8x128xf32>
    %cst = arith.constant 1.250000e-01 : f32
    %8 = vector.broadcast %cst : f32 to vector<8x128xf32>
    %9 = arith.mulf %7, %8 : vector<8x128xf32>
    %cst_6 = arith.constant -1.000000e+04 : f32
    %10 = vector.broadcast %cst_6 : f32 to vector<8x128xf32>
    %11 = arith.select %3, %10, %9 : vector<8x128xi1>, vector<8x128xf32>
    %cst_7 = arith.constant dense<0xFF800000> : vector<8xf32>
    %12 = vector.multi_reduction <maximumf>, %11, %cst_7 [1] : vector<8x128xf32> to vector<8xf32>
    %13 = vector.shape_cast %12 : vector<8xf32> to vector<8x1xf32>
    %14 = vector.broadcast %13 : vector<8x1xf32> to vector<8x128xf32>
    %15 = arith.subf %11, %14 : vector<8x128xf32>
    %16 = math.exp %15 : vector<8x128xf32>
    %cst_8 = arith.constant dense<0.000000e+00> : vector<8xf32>
    %17 = vector.multi_reduction <add>, %16, %cst_8 [1] : vector<8x128xf32> to vector<8xf32>
    %18 = vector.shape_cast %17 : vector<8xf32> to vector<8x1xf32>
    %19 = tpu.reciprocal %18 {approx = true} : vector<8x1xf32> -> vector<8x1xf32>
    %20 = vector.broadcast %19 : vector<8x1xf32> to vector<8x128xf32>
    %21 = arith.mulf %16, %20 : vector<8x128xf32>
    %22 = arith.truncf %21 : vector<8x128xf32> to vector<8x128xbf16>
    %c0_9 = arith.constant 0 : index
    %23 = arith.index_cast %c0_i32 : i32 to index
    %c0_10 = arith.constant 0 : index
    %c0_11 = arith.constant 0 : index
    %24 = vector.load %arg5[%c0_9, %23, %c0_10, %c0_11] : memref<1x4x8x128xbf16, #tpu.memory_space<vmem>>, vector<1x1x8x128xbf16>
    %25 = vector.shape_cast %24 : vector<1x1x8x128xbf16> to vector<8x128xbf16>
    %26 = vector.shape_cast %22 : vector<8x128xbf16> to vector<1x1x8x128xbf16>
    tpu.vector_store %arg5[%c0_9, %23, %c0_10, %c0_11], %26 {strides = array<i32>} : memref<1x4x8x128xbf16, #tpu.memory_space<vmem>>, vector<1x1x8x128xbf16>,
    %c1_i32 = arith.constant 1 : i32
    %c0_12 = arith.constant 0 : index
    %27 = arith.index_cast %c1_i32 : i32 to index
    %c0_13 = arith.constant 0 : index
    %c0_14 = arith.constant 0 : index
    %28 = vector.load %arg3[%c0_12, %27, %c0_13, %c0_14] : memref<1x4x8x128xbf16, #tpu.memory_space<vmem>>, vector<1x1x8x128xbf16>
    %29 = vector.shape_cast %28 : vector<1x1x8x128xbf16> to vector<8x128xbf16>
    %30 = arith.extf %29 : vector<8x128xbf16> to vector<8x128xf32>
    %cst_15 = arith.constant 1.250000e-01 : f32
    %31 = vector.broadcast %cst_15 : f32 to vector<8x128xf32>
    %32 = arith.mulf %30, %31 : vector<8x128xf32>
    %cst_16 = arith.constant -1.000000e+04 : f32
    %33 = vector.broadcast %cst_16 : f32 to vector<8x128xf32>
    %34 = arith.select %3, %33, %32 : vector<8x128xi1>, vector<8x128xf32>
    %cst_17 = arith.constant dense<0xFF800000> : vector<8xf32>
    %35 = vector.multi_reduction <maximumf>, %34, %cst_17 [1] : vector<8x128xf32> to vector<8xf32>
    %36 = vector.shape_cast %35 : vector<8xf32> to vector<8x1xf32>
    %37 = vector.broadcast %36 : vector<8x1xf32> to vector<8x128xf32>
    %38 = arith.subf %34, %37 : vector<8x128xf32>
    %39 = math.exp %38 : vector<8x128xf32>
    %cst_18 = arith.constant dense<0.000000e+00> : vector<8xf32>
    %40 = vector.multi_reduction <add>, %39, %cst_18 [1] : vector<8x128xf32> to vector<8xf32>
    %41 = vector.shape_cast %40 : vector<8xf32> to vector<8x1xf32>
    %42 = tpu.reciprocal %41 {approx = true} : vector<8x1xf32> -> vector<8x1xf32>
    %43 = vector.broadcast %42 : vector<8x1xf32> to vector<8x128xf32>
    %44 = arith.mulf %39, %43 : vector<8x128xf32>
    %45 = arith.truncf %44 : vector<8x128xf32> to vector<8x128xbf16>
    %c0_19 = arith.constant 0 : index
    %46 = arith.index_cast %c1_i32 : i32 to index
    %c0_20 = arith.constant 0 : index
    %c0_21 = arith.constant 0 : index
    %47 = vector.load %arg5[%c0_19, %46, %c0_20, %c0_21] : memref<1x4x8x128xbf16, #tpu.memory_space<vmem>>, vector<1x1x8x128xbf16>
    %48 = vector.shape_cast %47 : vector<1x1x8x128xbf16> to vector<8x128xbf16>
    %49 = vector.shape_cast %45 : vector<8x128xbf16> to vector<1x1x8x128xbf16>
    tpu.vector_store %arg5[%c0_19, %46, %c0_20, %c0_21], %49 {strides = array<i32>} : memref<1x4x8x128xbf16, #tpu.memory_space<vmem>>, vector<1x1x8x128xbf16>,
    %c2_i32 = arith.constant 2 : i32
    %c0_22 = arith.constant 0 : index
    %50 = arith.index_cast %c2_i32 : i32 to index
    %c0_23 = arith.constant 0 : index
    %c0_24 = arith.constant 0 : index
    %51 = vector.load %arg3[%c0_22, %50, %c0_23, %c0_24] : memref<1x4x8x128xbf16, #tpu.memory_space<vmem>>, vector<1x1x8x128xbf16>
    %52 = vector.shape_cast %51 : vector<1x1x8x128xbf16> to vector<8x128xbf16>
    %53 = arith.extf %52 : vector<8x128xbf16> to vector<8x128xf32>
    %cst_25 = arith.constant 1.250000e-01 : f32
    %54 = vector.broadcast %cst_25 : f32 to vector<8x128xf32>
    %55 = arith.mulf %53, %54 : vector<8x128xf32>
    %cst_26 = arith.constant -1.000000e+04 : f32
    %56 = vector.broadcast %cst_26 : f32 to vector<8x128xf32>
    %57 = arith.select %3, %56, %55 : vector<8x128xi1>, vector<8x128xf32>
    %cst_27 = arith.constant dense<0xFF800000> : vector<8xf32>
    %58 = vector.multi_reduction <maximumf>, %57, %cst_27 [1] : vector<8x128xf32> to vector<8xf32>
    %59 = vector.shape_cast %58 : vector<8xf32> to vector<8x1xf32>
    %60 = vector.broadcast %59 : vector<8x1xf32> to vector<8x128xf32>
    %61 = arith.subf %57, %60 : vector<8x128xf32>
    %62 = math.exp %61 : vector<8x128xf32>
    %cst_28 = arith.constant dense<0.000000e+00> : vector<8xf32>
    %63 = vector.multi_reduction <add>, %62, %cst_28 [1] : vector<8x128xf32> to vector<8xf32>
    %64 = vector.shape_cast %63 : vector<8xf32> to vector<8x1xf32>
    %65 = tpu.reciprocal %64 {approx = true} : vector<8x1xf32> -> vector<8x1xf32>
    %66 = vector.broadcast %65 : vector<8x1xf32> to vector<8x128xf32>
    %67 = arith.mulf %62, %66 : vector<8x128xf32>
    %68 = arith.truncf %67 : vector<8x128xf32> to vector<8x128xbf16>
    %c0_29 = arith.constant 0 : index
    %69 = arith.index_cast %c2_i32 : i32 to index
    %c0_30 = arith.constant 0 : index
    %c0_31 = arith.constant 0 : index
    %70 = vector.load %arg5[%c0_29, %69, %c0_30, %c0_31] : memref<1x4x8x128xbf16, #tpu.memory_space<vmem>>, vector<1x1x8x128xbf16>
    %71 = vector.shape_cast %70 : vector<1x1x8x128xbf16> to vector<8x128xbf16>
    %72 = vector.shape_cast %68 : vector<8x128xbf16> to vector<1x1x8x128xbf16>
    tpu.vector_store %arg5[%c0_29, %69, %c0_30, %c0_31], %72 {strides = array<i32>} : memref<1x4x8x128xbf16, #tpu.memory_space<vmem>>, vector<1x1x8x128xbf16>,
    %c3_i32 = arith.constant 3 : i32
    %c0_32 = arith.constant 0 : index
    %73 = arith.index_cast %c3_i32 : i32 to index
    %c0_33 = arith.constant 0 : index
    %c0_34 = arith.constant 0 : index
    %74 = vector.load %arg3[%c0_32, %73, %c0_33, %c0_34] : memref<1x4x8x128xbf16, #tpu.memory_space<vmem>>, vector<1x1x8x128xbf16>
    %75 = vector.shape_cast %74 : vector<1x1x8x128xbf16> to vector<8x128xbf16>
    %76 = arith.extf %75 : vector<8x128xbf16> to vector<8x128xf32>
    %cst_35 = arith.constant 1.250000e-01 : f32
    %77 = vector.broadcast %cst_35 : f32 to vector<8x128xf32>
    %78 = arith.mulf %76, %77 : vector<8x128xf32>
    %cst_36 = arith.constant -1.000000e+04 : f32
    %79 = vector.broadcast %cst_36 : f32 to vector<8x128xf32>
    %80 = arith.select %3, %79, %78 : vector<8x128xi1>, vector<8x128xf32>
    %cst_37 = arith.constant dense<0xFF800000> : vector<8xf32>
    %81 = vector.multi_reduction <maximumf>, %80, %cst_37 [1] : vector<8x128xf32> to vector<8xf32>
    %82 = vector.shape_cast %81 : vector<8xf32> to vector<8x1xf32>
    %83 = vector.broadcast %82 : vector<8x1xf32> to vector<8x128xf32>
    %84 = arith.subf %80, %83 : vector<8x128xf32>
    %85 = math.exp %84 : vector<8x128xf32>
    %cst_38 = arith.constant dense<0.000000e+00> : vector<8xf32>
    %86 = vector.multi_reduction <add>, %85, %cst_38 [1] : vector<8x128xf32> to vector<8xf32>
    %87 = vector.shape_cast %86 : vector<8xf32> to vector<8x1xf32>
    %88 = tpu.reciprocal %87 {approx = true} : vector<8x1xf32> -> vector<8x1xf32>
    %89 = vector.broadcast %88 : vector<8x1xf32> to vector<8x128xf32>
    %90 = arith.mulf %85, %89 : vector<8x128xf32>
    %91 = arith.truncf %90 : vector<8x128xf32> to vector<8x128xbf16>
    %c0_39 = arith.constant 0 : index
    %92 = arith.index_cast %c3_i32 : i32 to index
    %c0_40 = arith.constant 0 : index
    %c0_41 = arith.constant 0 : index
    %93 = vector.load %arg5[%c0_39, %92, %c0_40, %c0_41] : memref<1x4x8x128xbf16, #tpu.memory_space<vmem>>, vector<1x1x8x128xbf16>
    %94 = vector.shape_cast %93 : vector<1x1x8x128xbf16> to vector<8x128xbf16>
    %95 = vector.shape_cast %91 : vector<8x128xbf16> to vector<1x1x8x128xbf16>
    tpu.vector_store %arg5[%c0_39, %92, %c0_40, %c0_41], %95 {strides = array<i32>} : memref<1x4x8x128xbf16, #tpu.memory_space<vmem>>, vector<1x1x8x128xbf16>,
    %c4_i32 = arith.constant 4 : i32
    return
  }
  func.func @transform_0(%arg0: i32, %arg1: i32, %arg2: i32) -> (i32, i32, i32, i32) {
    %c0_i32 = arith.constant 0 : i32
    %c0_i32_0 = arith.constant 0 : i32
    return %arg0, %arg2, %arg1, %c0_i32 : i32, i32, i32, i32
  }
  func.func @transform_1(%arg0: i32, %arg1: i32, %arg2: i32) -> (i32, i32, i32, i32) {
    %c0_i32 = arith.constant 0 : i32
    %c0_i32_0 = arith.constant 0 : i32
    %c0_i32_1 = arith.constant 0 : i32
    return %arg0, %c0_i32, %arg1, %c0_i32_0 : i32, i32, i32, i32
  }
  func.func @transform_2(%arg0: i32, %arg1: i32, %arg2: i32) -> (i32, i32, i32, i32) {
    %c0_i32 = arith.constant 0 : i32
    %c0_i32_0 = arith.constant 0 : i32
    return %arg0, %arg2, %arg1, %c0_i32 : i32, i32, i32, i32
  }
}

</mosaic_0001>

<llo_original>
// kernel: tpu_custom_call.1
$region0: #{tpu_custom_call.1}
  #allocation0 [shape = 'u32[]', space=smem, size = 0x4, offset = 0x4, fixed_abs, tag = 'smem constant byte address 0x4 - core index']
  #allocation1 [shape = 'u32[72,128]{1,0:T(1,128)}', space=vmem, size = 0x9000, scoped, tag = 'internal scratch']
  %s0 = inlined_call_operand.hbm [shape: bf16[2,4,8,128], index: 0, kind: input, shape index: {}]
  %s1 = inlined_call_operand.hbm [shape: s8[2,1,8,128], index: 1, kind: input, shape index: {}]
  %s2 = inlined_call_operand.hbm [shape: bf16[2,4,8,128], index: 2, kind: output, shape index: {}]
  %s3 = sld [smem:[#allocation0]]
  $region49: #{tpu_custom_call.1} parent=0
    _
  %s5 = ssub.s32 1, %s3
  %s6 = scalar_select 0, %s5, %s3
  $region1: #{tpu_custom_call.1} parent=0
    #allocation2 [shape = 'u8[16384]{0}', space=vmem, size = 0x4000, scoped, tag = 'input window, operand 0']
    #allocation3 [shape = 's32[2]{0}', space=sflag, size = 0x8, scoped, tag = 'scoped memory for tpu_custom_call.1']
    #allocation4 [shape = 's32[2]{0}', space=sflag, size = 0x8, scoped, tag = 'scoped memory for tpu_custom_call.1']
    #allocation5 [shape = 'u8[2048]{0}', space=vmem, size = 0x800, scoped, tag = 'input window, operand 1']
    #allocation6 [shape = 's32[2]{0}', space=sflag, size = 0x8, scoped, tag = 'scoped memory for tpu_custom_call.1']
    #allocation7 [shape = 'u8[16384]{0}', space=vmem, size = 0x4000, scoped, tag = 'output window, operand 0']
    %7 = vsyncpa [#allocation3], 0
    %s8 = scalar_lea.sflag [#allocation3], 1
    %9 = vsyncpa %s8, 0
    %10 = vsyncpa [#allocation6], 0
    %s11 = scalar_lea.sflag [#allocation6], 1
    %12 = vsyncpa %s11, 0
    %13 = vsyncpa [#allocation4], 0
    %s14 = scalar_lea.sflag [#allocation4], 1
    %15 = vsyncpa %s14, 0
    loop: start=0, step=1, limit=4
    $region2: #{tpu_custom_call.1} parent=1 // loop_pre_header
      _
    $region3: #{tpu_custom_call.1} parent=1 // loop_header
      %s17 = sphi 0, %s21
      %p18 = scmp.ge.s32.totalorder %s17, 4
      %s24 = sphi 0, %s43
      %s25 = sphi 0, %s39
      %s26 = sphi 0, %s35
      %s27 = sphi 0, %s24
      %s28 = sphi 0, %s25
      %s29 = sphi 0, %s26
      %s30 = sphi 0, %s27
      %s31 = sphi 0, %s28
      %s32 = sphi 0, %s29
      %s50 = sphi 0, %s52
      %s53 = sphi 0, %s50
      %s54 = sphi 0, %s53
      %s70 = sphi 0, %s54
      %s78 = sphi 0, %s80
      %s81 = sphi 0, %s78
      %s82 = sphi 0, %s81
      %s98 = sphi 0, %s82
      %s108 = sphi 0, %s110
      %s111 = sphi 0, %s108
      %s112 = sphi 0, %s111
      %s128 = sphi 0, %s112
    $region4: #{tpu_custom_call.1} parent=1 // loop_header_branch
      %20 = sbr.rel (%p18) target = $region8
    $region5: #{tpu_custom_call.1} parent=1 // loop_body
      %s22 = ssub.s32 %s17, 1
      %s23 = ssub.s32 %s17, 2
      %s33 = sadd.s32 1, %s26
      %p34 = scmp.ge.s32.totalorder %s33, 1
      %s35 = scalar_select %p34, 0, %s33
      %s36 = sadd.s32 1, %s25
      %s37 = scalar_select %p34, %s36, %s25
      %p38 = scmp.ge.s32.totalorder %s37, 1
      %s39 = scalar_select %p38, 0, %s37
      %s40 = sadd.s32 1, %s24
      %s41 = scalar_select %p38, %s40, %s24
      %p42 = scmp.ge.s32.totalorder %s41, 2
      %s43 = scalar_select %p42, 0, %s41
      %s44 = ssub.s32 %s24, %s43
      %s45 = ssub.s32 %s26, %s35
      %s46 = sor.u32 %s44, %s45
      %s47 = ssub.s32 %s25, %s39
      %s48 = sor.u32 %s46, %s47
      %p49 = scmp.eq.s32.totalorder %s48, 0
      %s51 = sadd.s32 %s50, 1
      %s52 = scalar_select %p49, %s50, %s51
      %p55 = pneg %p49
      %p56 = scmp.eq.s32.totalorder %s17, 1
      %p57 = por %p55, %p56
      %p58 = scmp.ne.s32.totalorder %s50, %s53
      %p59 = scmp.eq.s32.totalorder %s17, 0
      %p60 = por %p58, %p59
      %p61 = scmp.ne.s32.totalorder %s50, %s53
      %p62 = scmp.eq.s32.totalorder %s22, 1
      %p63 = por %p61, %p62
      %p64 = scmp.ne.s32.totalorder %s53, %s54
      %p65 = scmp.eq.s32.totalorder %s22, 0
      %p66 = por %p64, %p65
      %p67 = scmp.ne.s32.totalorder %s53, %s54
      %p68 = scmp.eq.s32.totalorder %s23, 1
      %p69 = por %p67, %p68
      %p71 = scmp.ne.s32.totalorder %s54, %s70
      %p72 = scmp.eq.s32.totalorder %s23, 0
      %p73 = por %p71, %p72
      %s74 = ssub.s32 %s24, %s43
      %s75 = ssub.s32 %s25, %s39
      %s76 = sor.u32 %s74, %s75
      %p77 = scmp.eq.s32.totalorder %s76, 0
      %s79 = sadd.s32 %s78, 1
      %s80 = scalar_select %p77, %s78, %s79
      %p83 = pneg %p77
      %p84 = scmp.eq.s32.totalorder %s17, 1
      %p85 = por %p83, %p84
      %p86 = scmp.ne.s32.totalorder %s78, %s81
      %p87 = scmp.eq.s32.totalorder %s17, 0
      %p88 = por %p86, %p87
      %p89 = scmp.ne.s32.totalorder %s78, %s81
      %p90 = scmp.eq.s32.totalorder %s22, 1
      %p91 = por %p89, %p90
      %p92 = scmp.ne.s32.totalorder %s81, %s82
      %p93 = scmp.eq.s32.totalorder %s22, 0
      %p94 = por %p92, %p93
      %p95 = scmp.ne.s32.totalorder %s81, %s82
      %p96 = scmp.eq.s32.totalorder %s23, 1
      %p97 = por %p95, %p96
      %p99 = scmp.ne.s32.totalorder %s82, %s98
      %p100 = scmp.eq.s32.totalorder %s23, 0
      %p101 = por %p99, %p100
      %s102 = ssub.s32 %s24, %s43
      %s103 = ssub.s32 %s26, %s35
      %s104 = sor.u32 %s102, %s103
      %s105 = ssub.s32 %s25, %s39
      %s106 = sor.u32 %s104, %s105
      %p107 = scmp.eq.s32.totalorder %s106, 0
      %s109 = sadd.s32 %s108, 1
      %s110 = scalar_select %p107, %s108, %s109
      %p113 = pneg %p107
      %p114 = scmp.eq.s32.totalorder %s17, 1
      %p115 = por %p113, %p114
      %p116 = scmp.ne.s32.totalorder %s108, %s111
      %p117 = scmp.eq.s32.totalorder %s17, 0
      %p118 = por %p116, %p117
      %p119 = scmp.ne.s32.totalorder %s108, %s111
      %p120 = scmp.eq.s32.totalorder %s22, 1
      %p121 = por %p119, %p120
      %p122 = scmp.ne.s32.totalorder %s111, %s112
      %p123 = scmp.eq.s32.totalorder %s22, 0
      %p124 = por %p122, %p123
      %p125 = scmp.ne.s32.totalorder %s111, %s112
      %p126 = scmp.eq.s32.totalorder %s23, 1
      %p127 = por %p125, %p126
      %p129 = scmp.ne.s32.totalorder %s112, %s128
      %p130 = scmp.eq.s32.totalorder %s23, 0
      %p131 = por %p129, %p130
      %p132 = scmp.le.s32.totalorder 1, %s17
      %p133 = scmp.lt.s32.totalorder %s17, 3
      %p134 = pnand %p132, %p133
      %p135 = pneg %p134
      // Predicated region
      $region9: #{tpu_custom_call.1} parent=5 // pred_check
        _
      $region10: #{tpu_custom_call.1} parent=5 // pred_check_branch
        %137 = sbr.rel (%p134) target = $region12
      $region11: #{tpu_custom_call.1} parent=5 // pred_region
        %s138 = ssub.s32 %s17, 1
      $region12: #{tpu_custom_call.1} parent=5 // pred_fallthru
        _
      %p139 = scmp.lt.s32.totalorder %s17, 2
      // Predicated region
      $region13: #{tpu_custom_call.1} parent=5 // pred_check
        %p140 = pneg %p139
      $region14: #{tpu_custom_call.1} parent=5 // pred_check_branch
        %142 = sbr.rel (%p140) target = $region16
      $region15: #{tpu_custom_call.1} parent=5 // pred_region
        // Predicated region
        $region17: #{tpu_custom_call.1} parent=15 // pred_check
          %p143 = pneg %p60
        $region18: #{tpu_custom_call.1} parent=15 // pred_check_branch
          %145 = sbr.rel (%p143) target = $region20
        $region19: #{tpu_custom_call.1} parent=15 // pred_region
          %s146 = sand.u32 %s50, 1
          %s147 = scalar_lea.sflag [#allocation3], %s146
          %s148 = sand.u32 %s50, 1
          %s149 = smul.addr %s148, 16
          %s150 = scalar_lea.vmem [#allocation2], %s149
          %s151 = smul.u32 4, %s26
          %153 = vsyncadd %s147, 0
          %s154 = sadd.s32 %s25, %s151
          %s155 = smul.addr %s24, 4
          %s156 = sadd.s32 %s154, %s155
          %s157 = smul.addr %s156, 4
          %s158 = scalar_lea.hbm %s0, %s157
          %s159 = sshll.u32 %s158, 4
          %s160 = int_to_ptr.hbm [resolvable:$true] %s159
          %s161 = sshll.u32 %s150, 4
          %s162 = int_to_ptr.vmem [resolvable:$true] %s161
          %167 = dma.hbm_to_vmem [thread:$0]  %s160, 256, %s162, %s147, 64, 64, 4
        $region20: #{tpu_custom_call.1} parent=15 // pred_fallthru
          _
        // Predicated region
        $region21: #{tpu_custom_call.1} parent=15 // pred_check
          %p168 = pneg %p88
        $region22: #{tpu_custom_call.1} parent=15 // pred_check_branch
          %170 = sbr.rel (%p168) target = $region24
        $region23: #{tpu_custom_call.1} parent=15 // pred_region
          %s171 = sand.u32 %s78, 1
          %s172 = scalar_lea.sflag [#allocation6], %s171
          %s173 = sand.u32 %s78, 1
          %s174 = smul.addr %s173, 2
          %s175 = scalar_lea.vmem [#allocation5], %s174
          %177 = vsyncadd %s172, 0
          %s178 = sadd.s32 %s25, %s24
          %s179 = smul.addr %s178, 2
          %s180 = scalar_lea.hbm %s1, %s179
          %s182 = sshll.u32 %s180, 4
          %s183 = int_to_ptr.hbm [resolvable:$true] %s182
          %s184 = sshll.u32 %s175, 4
          %s185 = int_to_ptr.vmem [resolvable:$true] %s184
          %187 = dma.hbm_to_vmem [thread:$0]  %s183, 32, %s185, %s172
        $region24: #{tpu_custom_call.1} parent=15 // pred_fallthru
          _
      $region16: #{tpu_custom_call.1} parent=5 // pred_fallthru
        _
      %p188 = scmp.le.s32.totalorder 1, %s17
      %p189 = scmp.lt.s32.totalorder %s17, 3
      %p190 = pnand %p188, %p189
      %p191 = pneg %p190
      // Predicated region
      $region25: #{tpu_custom_call.1} parent=5 // pred_check
        _
      $region26: #{tpu_custom_call.1} parent=5 // pred_check_branch
        %193 = sbr.rel (%p190) target = $region28
      $region27: #{tpu_custom_call.1} parent=5 // pred_region
        %s194 = ssub.s32 %s17, 1
        %s195 = sand.u32 %s53, 1
        %s196 = scalar_lea.sflag [#allocation3], %s195
        %s197 = sand.u32 %s53, 1
        %s198 = smul.addr %s197, 16
        %s199 = scalar_lea.vmem [#allocation2], %s198
        // Predicated region
        $region29: #{tpu_custom_call.1} parent=27 // pred_check
          %p200 = pneg %p66
        $region30: #{tpu_custom_call.1} parent=27 // pred_check_branch
          %202 = sbr.rel (%p200) target = $region32
        $region31: #{tpu_custom_call.1} parent=27 // pred_region
          %204 = dma.done %s196, 256
        $region32: #{tpu_custom_call.1} parent=27 // pred_fallthru
          _
        %s205 = sand.u32 %s81, 1
        %s206 = scalar_lea.sflag [#allocation6], %s205
        %s207 = sand.u32 %s81, 1
        %s208 = smul.addr %s207, 2
        %s209 = scalar_lea.vmem [#allocation5], %s208
        // Predicated region
        $region33: #{tpu_custom_call.1} parent=27 // pred_check
          %p210 = pneg %p94
        $region34: #{tpu_custom_call.1} parent=27 // pred_check_branch
          %212 = sbr.rel (%p210) target = $region36
        $region35: #{tpu_custom_call.1} parent=27 // pred_region
          %214 = dma.done %s206, 32
        $region36: #{tpu_custom_call.1} parent=27 // pred_fallthru
          _
        %s215 = sand.u32 %s53, 1
        %s216 = scalar_lea.sflag [#allocation3], %s215
        %s217 = sand.u32 %s53, 1
        %s218 = smul.addr %s217, 16
        %s219 = scalar_lea.vmem [#allocation2], %s218
        %p220 = pneg %p66
        %p221 = pneg %p63
        %s222 = sand.u32 %s81, 1
        %s223 = scalar_lea.sflag [#allocation6], %s222
        %s224 = sand.u32 %s81, 1
        %s225 = smul.addr %s224, 2
        %s226 = scalar_lea.vmem [#allocation5], %s225
        %p227 = pneg %p94
        %p228 = pneg %p91
        %p229 = pneg %p124
        %p230 = pneg %p121
        %s231 = sand.u32 %s111, 1
        %s232 = scalar_lea.sflag [#allocation4], %s231
        %s233 = sand.u32 %s111, 1
        %s234 = smul.addr %s233, 16
        %s235 = scalar_lea.vmem [#allocation7], %s234
        %s236 = smul.u32 4, %s29
        %s237 = smul.u32 4, %s29
        %v240 = vld [vmem:[%s209] sm:$0x3]
        %vm241 = vnez %v240
        %v242 = vld [vmem:[%s199] sm:$0xf]
        %v243 = vunpack.c.l.bf16 %v242
        %v244 = vmul.f32 %v243, 0.125
        %v245 = vsel %vm241, 16843009, 0
        %v246 = vunpack.c.0.s8 %v245
        %vm247 = vcmp.ne.s32.totalorder %v246, 0
        %v248 = vsel %vm247, -10000.0, %v244
        %249 = vmax.xlane.f32.xlu0 %v248
        %v250 = vpop.xlane.xlu0 %249
        %v251 = vsub.f32 %v248, %v250
        %v252 = vmul.f32 %v251, 1.442695
        %v253 = vpow.pop %v252
        %254 = vadd.xlane.f32.xlu0 %v253
        %v255 = vpop.xlane.xlu0 %254
        %v256 = vrcp.pop %v255
        %v257 = vmul.f32 %v253, %v256
        %v258 = vpack.c.bf16 %v257, %v257
        %259 = vst [vmem:[%s235] sm:$0xf] %v258
        %s260 = scalar_lea.vmem %s199, 4 [#allocation2]
        %v261 = vld [vmem:[%s260] sm:$0xf]
        %v262 = vunpack.c.l.bf16 %v261
        %v263 = vmul.f32 %v262, 0.125
        %v264 = vsel %vm247, -10000.0, %v263
        %265 = vmax.xlane.f32.xlu0 %v264
        %v266 = vpop.xlane.xlu0 %265
        %v267 = vsub.f32 %v264, %v266
        %v268 = vmul.f32 %v267, 1.442695
        %v269 = vpow.pop %v268
        %270 = vadd.xlane.f32.xlu0 %v269
        %v271 = vpop.xlane.xlu0 %270
        %v272 = vrcp.pop %v271
        %v273 = vmul.f32 %v269, %v272
        %v274 = vpack.c.bf16 %v273, %v273
        %s275 = scalar_lea.vmem %s235, 4 [#allocation7]
        %276 = vst [vmem:[%s275] sm:$0xf] %v274
        %s277 = scalar_lea.vmem %s199, 8 [#allocation2]
        %v278 = vld [vmem:[%s277] sm:$0xf]
        %v279 = vunpack.c.l.bf16 %v278
        %v280 = vmul.f32 %v279, 0.125
        %v281 = vsel %vm247, -10000.0, %v280
        %282 = vmax.xlane.f32.xlu0 %v281
        %v283 = vpop.xlane.xlu0 %282
        %v284 = vsub.f32 %v281, %v283
        %v285 = vmul.f32 %v284, 1.442695
        %v286 = vpow.pop %v285
        %287 = vadd.xlane.f32.xlu0 %v286
        %v288 = vpop.xlane.xlu0 %287
        %v289 = vrcp.pop %v288
        %v290 = vmul.f32 %v286, %v289
        %v291 = vpack.c.bf16 %v290, %v290
        %s292 = scalar_lea.vmem %s235, 8 [#allocation7]
        %293 = vst [vmem:[%s292] sm:$0xf] %v291
        %s294 = scalar_lea.vmem %s199, 12 [#allocation2]
        %v295 = vld [vmem:[%s294] sm:$0xf]
        %v296 = vunpack.c.l.bf16 %v295
        %v297 = vmul.f32 %v296, 0.125
        %v298 = vsel %vm247, -10000.0, %v297
        %299 = vmax.xlane.f32.xlu0 %v298
        %v300 = vpop.xlane.xlu0 %299
        %v301 = vsub.f32 %v298, %v300
        %v302 = vmul.f32 %v301, 1.442695
        %v303 = vpow.pop %v302
        %304 = vadd.xlane.f32.xlu0 %v303
        %v305 = vpop.xlane.xlu0 %304
        %v306 = vrcp.pop %v305
        %v307 = vmul.f32 %v303, %v306
        %v308 = vpack.c.bf16 %v307, %v307
        %s309 = scalar_lea.vmem %s235, 12 [#allocation7]
        %310 = vst [vmem:[%s309] sm:$0xf] %v308
        %s311 = sand.u32 %s111, 1
        %s312 = scalar_lea.sflag [#allocation4], %s311
        %s313 = sand.u32 %s111, 1
        %s314 = smul.addr %s313, 16
        %s315 = scalar_lea.vmem [#allocation7], %s314
        // Predicated region
        $region37: #{tpu_custom_call.1} parent=27 // pred_check
          %p316 = pneg %p121
        $region38: #{tpu_custom_call.1} parent=27 // pred_check_branch
          %318 = sbr.rel (%p316) target = $region40
        $region39: #{tpu_custom_call.1} parent=27 // pred_region
          %s319 = smul.u32 4, %s29
          %321 = vsyncadd %s312, 0
          %s322 = sadd.s32 %s28, %s319
          %s323 = smul.addr %s27, 4
          %s324 = sadd.s32 %s322, %s323
          %s325 = smul.addr %s324, 4
          %s326 = scalar_lea.hbm %s2, %s325
          %s327 = sshll.u32 %s315, 4
          %s328 = int_to_ptr.vmem [resolvable:$true] %s327
          %s329 = sshll.u32 %s326, 4
          %s330 = int_to_ptr.hbm [resolvable:$true] %s329
          %335 = dma.vmem_to_hbm [thread:$0]  %s328, 256, %s330, %s312, 64, 64, 4
        $region40: #{tpu_custom_call.1} parent=27 // pred_fallthru
          _
      $region28: #{tpu_custom_call.1} parent=5 // pred_fallthru
        _
      %p336 = scmp.le.s32.totalorder 2, %s17
      // Predicated region
      $region41: #{tpu_custom_call.1} parent=5 // pred_check
        %p337 = pneg %p336
      $region42: #{tpu_custom_call.1} parent=5 // pred_check_branch
        %339 = sbr.rel (%p337) target = $region44
      $region43: #{tpu_custom_call.1} parent=5 // pred_region
        %s340 = ssub.s32 %s17, 2
        // Predicated region
        $region45: #{tpu_custom_call.1} parent=43 // pred_check
          %p341 = pneg %p127
        $region46: #{tpu_custom_call.1} parent=43 // pred_check_branch
          %343 = sbr.rel (%p341) target = $region48
        $region47: #{tpu_custom_call.1} parent=43 // pred_region
          %s344 = sand.u32 %s112, 1
          %s345 = scalar_lea.sflag [#allocation4], %s344
          %s346 = sand.u32 %s112, 1
          %s347 = smul.addr %s346, 16
          %s348 = scalar_lea.vmem [#allocation7], %s347
          %350 = dma.done %s345, 256
        $region48: #{tpu_custom_call.1} parent=43 // pred_fallthru
          _
      $region44: #{tpu_custom_call.1} parent=5 // pred_fallthru
        _
    $region6: #{tpu_custom_call.1} parent=1 // loop_footer
      %s21 = sadd.s32 1, %s17
    $region7: #{tpu_custom_call.1} parent=1 // loop_footer_branch
      %16 = sbr.rel target = $region3
    $region8: #{tpu_custom_call.1} parent=1 // loop_exit
      _
    %351 = vsyncpa [#allocation3], 1
    %s352 = scalar_lea.sflag [#allocation3], 1
    %353 = vsyncpa %s352, 1
    %354 = vsyncpa [#allocation6], 1
    %s355 = scalar_lea.sflag [#allocation6], 1
    %356 = vsyncpa %s355, 1
    %357 = vsyncpa [#allocation4], 1
    %s358 = scalar_lea.sflag [#allocation4], 1
    %359 = vsyncpa %s358, 1

</llo_original>
